<compile_context>
chip_gen: v6e
topology: v6e:2x2x1
jax: 0.10.0
libtpu: 0.0.40
codegen_flags: <defaults>
</compile_context>

<pallas_src>
import math

import jax
import jax.numpy as jnp
from jax.experimental import pallas as pl
from jax.experimental.pallas import tpu as pltpu


def _get_pad(size: int, multiple: int):
    new_size = math.ceil(size / multiple) * multiple
    pad = new_size - size
    left = pad // 2
    return left, pad - left


def _largest_divisor_leq(n: int, cap: int) -> int:
    """Largest divisor of n that is <= cap."""
    cap = max(1, min(n, cap))
    for b in range(cap, 0, -1):
        if n % b == 0:
            return b
    return 1


def _sublane_count(dtype) -> int:
    """Sublane tile height for a dtype (f32 -> 8, bf16 -> 16, int8/fp8 -> 32)."""
    itemsize = jnp.dtype(dtype).itemsize
    return max(8, 8 * (4 // max(1, itemsize)))


def _tiled_slice_bytes(h: int, w: int, dtype) -> int:
    """VMEM bytes actually occupied by one (h, w) slice after (s, 128) tiling."""
    s = _sublane_count(dtype)
    hp = -(-h // s) * s
    wp = -(-w // 128) * 128
    return hp * wp * jnp.dtype(dtype).itemsize


def _vmem_budget_and_limit():
    """(slab budget, scoped vmem limit) in bytes, per TPU generation."""
    phys = 64 * 1024 * 1024  # conservative default (v7x per-TC VMEM)
    try:
        phys = int(pltpu.get_tpu_info().vmem_capacity_bytes)
    except Exception:
        pass
    if phys >= 128 * 1024 * 1024:          # v5e / v6e: plenty of headroom
        return 48 * 1024 * 1024, 96 * 1024 * 1024
    return 24 * 1024 * 1024, 40 * 1024 * 1024


def _choose_batch_block(nc: int, per_slice_bytes: int, budget: int) -> int:
    """Pick how many (H, W)/(Ho, Wo) slices to move per grid step."""
    b_cap = max(1, budget // (2 * per_slice_bytes))  # 2x: double-buffered in+out
    b = min(b_cap, nc)
    # Guarantee >= 2 grid steps when possible (v7x 2-TC sharding + pipelining).
    if nc >= 2:
        b = min(b, max(1, nc // 2))
    # Prefer >= 4 steps if each slab still carries a few MiB (overhead amortized).
    if nc >= 4:
        b4 = max(1, nc // 4)
        if b4 * per_slice_bytes >= (2 << 20):
            b = min(b, b4)
    # Prefer an exact divisor of nc near b (all blocks full); otherwise accept
    # a ragged last block (grid = cdiv) rather than collapsing to tiny B.
    d = _largest_divisor_leq(nc, b)
    if 2 * d >= b:
        b = d
    return b


def center_padding(x: jax.Array, multiple: int) -> jax.Array:
    """Zero-pads the last two dims of NCHW `x` up to a multiple, centered.

    Same semantics as DinoV2's CenterPadding (F.pad with pad//2 on the left).
    """
    N, C, H, W = x.shape
    ph_l, ph_r = _get_pad(H, multiple)
    pw_l, pw_r = _get_pad(W, multiple)

    # Early-out: skip a full HBM read + write when no padding is needed.
    if ph_l == 0 and ph_r == 0 and pw_l == 0 and pw_r == 0:
        return x

    Ho = H + ph_l + ph_r
    Wo = W + pw_l + pw_r

    # Collapse (N, C) into one batched axis and stream B channel-slices per
    # grid step: large contiguous slab DMAs for this bandwidth-bound copy.
    NC = N * C
    x3 = x.reshape(NC, H, W)  # free metadata reshape

    budget, vmem_limit = _vmem_budget_and_limit()
    per_slice_bytes = (_tiled_slice_bytes(H, W, x.dtype)
                       + _tiled_slice_bytes(Ho, Wo, x.dtype))
    B = _choose_batch_block(NC, per_slice_bytes, budget)
    grid_len = pl.cdiv(NC, B)
    # Keep the scoped limit above the (tiled) double-buffered slab footprint.
    vmem_limit = max(vmem_limit, 2 * B * per_slice_bytes + (2 << 20))

    def kernel(x_ref, o_ref):
        # One full-tile, lane-dense, unmasked zero store + one interior store:
        # fewest masked stores.  The duplicated interior writes are VMEM-only
        # traffic hidden under the HBM DMA; each HBM byte is written once.
        o_ref[...] = jnp.zeros_like(o_ref)
        # TODO(synk): an in-register jnp.pad of the slab followed by a single
        # aligned full-tile store would drop this masked interior store, but
        # pad/concat lowering in Mosaic is not guaranteed, so keep the
        # known-good ref store.
        # TODO(synk): for bf16/int8 inputs an odd ph_l is packed-row
        # misaligned (extra pack/unpack per vreg); ph_l is fixed by semantics.
        o_ref[:, ph_l:ph_l + H, pw_l:pw_l + W] = x_ref[...]

    itemsize = jnp.dtype(x.dtype).itemsize
    out3 = pl.pallas_call(
        kernel,
        out_shape=jax.ShapeDtypeStruct((NC, Ho, Wo), x.dtype),
        grid=(grid_len,),
        in_specs=[pl.BlockSpec((B, H, W), lambda i: (i, 0, 0))],
        out_specs=pl.BlockSpec((B, Ho, Wo), lambda i: (i, 0, 0)),
        compiler_params=pltpu.CompilerParams(
            dimension_semantics=("parallel",),  # lets v7x shard across 2 TCs
            vmem_limit_bytes=int(vmem_limit),
        ),
        cost_estimate=pl.CostEstimate(
            flops=0,
            transcendentals=0,
            bytes_accessed=NC * (H * W + Ho * Wo) * itemsize,
        ),
    )(x3)

    return out3.reshape(N, C, Ho, Wo)


if __name__ == "__main__":
    # DinoV2 uses patch-size multiples (e.g. 14). Small NCHW input.
    multiple = 14
    key = jax.random.PRNGKey(0)
    x = jax.random.normal(key, (2, 4, 16, 16), dtype=jnp.float32)

    out = jax.block_until_ready(center_padding(x, multiple))

    # Reference in plain JAX (same semantics as F.pad with the computed pads).
    ph_l, ph_r = _get_pad(x.shape[2], multiple)
    pw_l, pw_r = _get_pad(x.shape[3], multiple)
    ref = jnp.pad(x, ((0, 0), (0, 0), (ph_l, ph_r), (pw_l, pw_r)))

    assert out.shape == ref.shape, (out.shape, ref.shape)
    assert out.dtype == x.dtype
    assert jnp.allclose(out, ref), "mismatch vs reference padding"

    print("KERNEL_OK")
</pallas_src>

<mosaic_0001>
module attributes {stable_mosaic.version = 11 : i64} {
  func.func @kernel(%arg0: i32, %arg1: memref<4x16x16xf32, #tpu.memory_space<vmem>>, %arg2: memref<4x28x28xf32, #tpu.memory_space<vmem>>) attributes {dimension_semantics = [#tpu.dimension_semantics<parallel>], iteration_bounds = array<i64: 2>, scalar_prefetch = 0 : i64, scratch_operands = 0 : i64, tpu.core_type = #tpu.core_type<tc>, window_params = [{transform_indices = @transform_0, window_bounds = array<i64: 4, 16, 16>}, {transform_indices = @transform_1, window_bounds = array<i64: 4, 28, 28>}]} {
    %cst = arith.constant 0.000000e+00 : f32
    %0 = vector.broadcast %cst : f32 to vector<4x28x28xf32>
    %c0 = arith.constant 0 : index
    %c0_0 = arith.constant 0 : index
    %c0_1 = arith.constant 0 : index
    %1 = vector.load %arg2[%c0, %c0_0, %c0_1] : memref<4x28x28xf32, #tpu.memory_space<vmem>>, vector<4x28x28xf32>
    tpu.vector_store %arg2[%c0, %c0_0, %c0_1], %0 {strides = array<i32>} : memref<4x28x28xf32, #tpu.memory_space<vmem>>, vector<4x28x28xf32>,
    %c0_2 = arith.constant 0 : index
    %c0_3 = arith.constant 0 : index
    %c0_4 = arith.constant 0 : index
    %2 = vector.load %arg1[%c0_2, %c0_3, %c0_4] : memref<4x16x16xf32, #tpu.memory_space<vmem>>, vector<4x16x16xf32>
    %c0_5 = arith.constant 0 : index
    %c6 = arith.constant 6 : index
    %c6_6 = arith.constant 6 : index
    %3 = vector.load %arg2[%c0_5, %c6, %c6_6] : memref<4x28x28xf32, #tpu.memory_space<vmem>>, vector<4x16x16xf32>
    tpu.vector_store %arg2[%c0_5, %c6, %c6_6], %2 {strides = array<i32>} : memref<4x28x28xf32, #tpu.memory_space<vmem>>, vector<4x16x16xf32>,
    return
  }
  func.func @transform_0(%arg0: i32) -> (i32, i32, i32) {
    %c0_i32 = arith.constant 0 : i32
    %c0_i32_0 = arith.constant 0 : i32
    %c0_i32_1 = arith.constant 0 : i32
    return %arg0, %c0_i32, %c0_i32_0 : i32, i32, i32
  }
  func.func @transform_1(%arg0: i32) -> (i32, i32, i32) {
    %c0_i32 = arith.constant 0 : i32
    %c0_i32_0 = arith.constant 0 : i32
    %c0_i32_1 = arith.constant 0 : i32
    return %arg0, %c0_i32, %c0_i32_0 : i32, i32, i32
  }
}

</mosaic_0001>

<llo_original>
// kernel: tpu_custom_call.1
$region0: #{tpu_custom_call.1}
  #allocation0 [shape = 'u32[]', space=smem, size = 0x4, offset = 0x4, fixed_abs, tag = 'smem constant byte address 0x4 - core index']
  #allocation1 [shape = 'u32[144,128]{1,0:T(1,128)}', space=vmem, size = 0x12000, scoped, tag = 'internal scratch']
  %s0 = inlined_call_operand.hbm [shape: f32[8,16,16], index: 0, kind: input, shape index: {}]
  %s1 = inlined_call_operand.vmem [shape: f32[8,28,28], index: 1, kind: output, shape index: {}]
  %s2 = sld [smem:[#allocation0]]
  $region41: #{tpu_custom_call.1} parent=0
    _
  %s4 = ssub.s32 1, %s2
  %s5 = scalar_select 0, %s4, %s2
  $region1: #{tpu_custom_call.1} parent=0
    #allocation2 [shape = 'u8[65536]{0}', space=vmem, size = 0x10000, scoped, tag = 'input window, operand 0']
    #allocation3 [shape = 's32[2]{0}', space=sflag, size = 0x8, scoped, tag = 'scoped memory for tpu_custom_call.1']
    %6 = vsyncpa [#allocation3], 0
    %s7 = scalar_lea.sflag [#allocation3], 1
    %8 = vsyncpa %s7, 0
    loop: start=0, step=1, limit=4
    $region2: #{tpu_custom_call.1} parent=1 // loop_pre_header
      _
    $region3: #{tpu_custom_call.1} parent=1 // loop_header
      %s10 = sphi 0, %s14
      %p11 = scmp.ge.s32.totalorder %s10, 4
      %s20 = sphi 0, %s22
      %s23 = sphi 0, %s20
      %s24 = sphi 0, %s23
      %s40 = sphi 0, %s24
      %s46 = sphi 0, %s48
      %s49 = sphi 0, %s46
      %s50 = sphi 0, %s49
      %s66 = sphi 0, %s50
    $region4: #{tpu_custom_call.1} parent=1 // loop_header_branch
      %13 = sbr.rel (%p11) target = $region8
    $region5: #{tpu_custom_call.1} parent=1 // loop_body
      %s15 = ssub.s32 %s10, 1
      %s16 = ssub.s32 %s10, 2
      %s17 = sadd.s32 %s10, 1
      %s18 = ssub.s32 %s10, %s17
      %p19 = scmp.eq.s32.totalorder %s18, 0
      %s21 = sadd.s32 %s20, 1
      %s22 = scalar_select %p19, %s20, %s21
      %p25 = pneg %p19
      %p26 = scmp.eq.s32.totalorder %s10, 1
      %p27 = por %p25, %p26
      %p28 = scmp.ne.s32.totalorder %s20, %s23
      %p29 = scmp.eq.s32.totalorder %s10, 0
      %p30 = por %p28, %p29
      %p31 = scmp.ne.s32.totalorder %s20, %s23
      %p32 = scmp.eq.s32.totalorder %s15, 1
      %p33 = por %p31, %p32
      %p34 = scmp.ne.s32.totalorder %s23, %s24
      %p35 = scmp.eq.s32.totalorder %s15, 0
      %p36 = por %p34, %p35
      %p37 = scmp.ne.s32.totalorder %s23, %s24
      %p38 = scmp.eq.s32.totalorder %s16, 1
      %p39 = por %p37, %p38
      %p41 = scmp.ne.s32.totalorder %s24, %s40
      %p42 = scmp.eq.s32.totalorder %s16, 0
      %p43 = por %p41, %p42
      %s44 = ssub.s32 %s10, %s17
      %p45 = scmp.eq.s32.totalorder %s44, 0
      %s47 = sadd.s32 %s46, 1
      %s48 = scalar_select %p45, %s46, %s47
      %p51 = pneg %p45
      %p52 = scmp.eq.s32.totalorder %s10, 1
      %p53 = por %p51, %p52
      %p54 = scmp.ne.s32.totalorder %s46, %s49
      %p55 = scmp.eq.s32.totalorder %s10, 0
      %p56 = por %p54, %p55
      %p57 = scmp.ne.s32.totalorder %s46, %s49
      %p58 = scmp.eq.s32.totalorder %s15, 1
      %p59 = por %p57, %p58
      %p60 = scmp.ne.s32.totalorder %s49, %s50
      %p61 = scmp.eq.s32.totalorder %s15, 0
      %p62 = por %p60, %p61
      %p63 = scmp.ne.s32.totalorder %s49, %s50
      %p64 = scmp.eq.s32.totalorder %s16, 1
      %p65 = por %p63, %p64
      %p67 = scmp.ne.s32.totalorder %s50, %s66
      %p68 = scmp.eq.s32.totalorder %s16, 0
      %p69 = por %p67, %p68
      %p70 = scmp.le.s32.totalorder 1, %s10
      %p71 = scmp.lt.s32.totalorder %s10, 3
      %p72 = pnand %p70, %p71
      %p73 = pneg %p72
      // Predicated region
      $region9: #{tpu_custom_call.1} parent=5 // pred_check
        _
      $region10: #{tpu_custom_call.1} parent=5 // pred_check_branch
        %75 = sbr.rel (%p72) target = $region12
      $region11: #{tpu_custom_call.1} parent=5 // pred_region
        %s76 = ssub.s32 %s10, 1
      $region12: #{tpu_custom_call.1} parent=5 // pred_fallthru
        _
      %p77 = scmp.lt.s32.totalorder %s10, 2
      // Predicated region
      $region13: #{tpu_custom_call.1} parent=5 // pred_check
        %p78 = pneg %p77
      $region14: #{tpu_custom_call.1} parent=5 // pred_check_branch
        %80 = sbr.rel (%p78) target = $region16
      $region15: #{tpu_custom_call.1} parent=5 // pred_region
        // Predicated region
        $region17: #{tpu_custom_call.1} parent=15 // pred_check
          %p81 = pneg %p30
        $region18: #{tpu_custom_call.1} parent=15 // pred_check_branch
          %83 = sbr.rel (%p81) target = $region20
        $region19: #{tpu_custom_call.1} parent=15 // pred_region
          %s84 = sand.u32 %s20, 1
          %s85 = scalar_lea.sflag [#allocation3], %s84
          %s86 = sand.u32 %s20, 1
          %s87 = smul.addr %s86, 64
          %s88 = scalar_lea.vmem [#allocation2], %s87
          %s89 = smul.u32 4, %s10
          %s91 = ssub.s32 1024, 1024
          %92 = vsyncadd %s85, %s91
          %s93 = smul.addr %s89, 2
          %s94 = smul.addr %s93, 128
          %s95 = scalar_lea.hbm %s0, %s94
          %s96 = sshll.u32 %s88, 4
          %s97 = int_to_ptr.vmem [resolvable:$true] %s96
          %102 = dma.hbm_to_vmem [thread:$0]  %s95, 1024, %s97, %s85, 128, 128, 8
        $region20: #{tpu_custom_call.1} parent=15 // pred_fallthru
          _
      $region16: #{tpu_custom_call.1} parent=5 // pred_fallthru
        _
      %p103 = scmp.le.s32.totalorder 1, %s10
      %p104 = scmp.lt.s32.totalorder %s10, 3
      %p105 = pnand %p103, %p104
      %p106 = pneg %p105
      // Predicated region
      $region21: #{tpu_custom_call.1} parent=5 // pred_check
        _
      $region22: #{tpu_custom_call.1} parent=5 // pred_check_branch
        %108 = sbr.rel (%p105) target = $region24
      $region23: #{tpu_custom_call.1} parent=5 // pred_region
        %s109 = ssub.s32 %s10, 1
        %s110 = sand.u32 %s23, 1
        %s111 = scalar_lea.sflag [#allocation3], %s110
        %s112 = sand.u32 %s23, 1
        %s113 = smul.addr %s112, 64
        %s114 = scalar_lea.vmem [#allocation2], %s113
        // Predicated region
        $region25: #{tpu_custom_call.1} parent=23 // pred_check
          %p115 = pneg %p36
        $region26: #{tpu_custom_call.1} parent=23 // pred_check_branch
          %117 = sbr.rel (%p115) target = $region28
        $region27: #{tpu_custom_call.1} parent=23 // pred_region
          %118 = dma.done %s111, 1024
        $region28: #{tpu_custom_call.1} parent=23 // pred_fallthru
          _
        %s119 = sand.u32 %s23, 1
        %s120 = scalar_lea.sflag [#allocation3], %s119
        %s121 = sand.u32 %s23, 1
        %s122 = smul.addr %s121, 64
        %s123 = scalar_lea.vmem [#allocation2], %s122
        %p124 = pneg %p36
        %p125 = pneg %p33
        %p126 = pneg %p62
        %p127 = pneg %p59
        %s128 = smul.u32 4, %s15
        %p129 = scmp.lt.s32.totalorder %s128, 7
        %s130 = scalar_select %p129, %s128, 7
        %s131 = smul.addr %s130, 4
        %s132 = smul.addr %s131, 8
        %s133 = scalar_lea.vmem %s1, %s132
        %s134 = smul.u32 4, %s15
        %s135 = smul.u32 4, %s15
        %p136 = scmp.lt.s32.totalorder %s135, 7
        %s137 = scalar_select %p136, %s135, 7
        %s138 = smul.addr %s137, 4
        %s139 = smul.addr %s138, 8
        %s140 = scalar_lea.vmem %s1, %s139
        %s141 = smul.u32 4, %s15
        %vm142 = vcmask 228352
        %143 = vst.msk [vmem:[%s140] sm:$0xff] %vm142, 0.0
        %144 = vst.msk [vmem:[%s140 + $0x8] sm:$0xff] %vm142, 0.0
        %145 = vst.msk [vmem:[%s140 + $0x10] sm:$0xff] %vm142, 0.0
        %vm146 = vcmask 224256
        %147 = vst.msk [vmem:[%s140 + $0x18] sm:$0xf] %vm146, 0.0
        %148 = vst.msk [vmem:[%s140 + $0x20] sm:$0xff] %vm142, 0.0
        %149 = vst.msk [vmem:[%s140 + $0x28] sm:$0xff] %vm142, 0.0
        %150 = vst.msk [vmem:[%s140 + $0x30] sm:$0xff] %vm142, 0.0
        %151 = vst.msk [vmem:[%s140 + $0x38] sm:$0xf] %vm146, 0.0
        %152 = vst.msk [vmem:[%s140 + $0x40] sm:$0xff] %vm142, 0.0
        %153 = vst.msk [vmem:[%s140 + $0x48] sm:$0xff] %vm142, 0.0
        %154 = vst.msk [vmem:[%s140 + $0x50] sm:$0xff] %vm142, 0.0
        %155 = vst.msk [vmem:[%s140 + $0x58] sm:$0xf] %vm146, 0.0
        %156 = vst.msk [vmem:[%s140 + $0x60] sm:$0xff] %vm142, 0.0
        %157 = vst.msk [vmem:[%s140 + $0x68] sm:$0xff] %vm142, 0.0
        %158 = vst.msk [vmem:[%s140 + $0x70] sm:$0xff] %vm142, 0.0
        %159 = vst.msk [vmem:[%s140 + $0x78] sm:$0xf] %vm146, 0.0
        %v160 = vld [vmem:[%s114] sm:$0xff]
        %v161 = vld [vmem:[%s114 + $0x8] sm:$0xff]
        %v162 = vld [vmem:[%s114 + $0x10] sm:$0xff]
        %v163 = vld [vmem:[%s114 + $0x18] sm:$0xff]
        %v164 = vld [vmem:[%s114 + $0x20] sm:$0xff]
        %v165 = vld [vmem:[%s114 + $0x28] sm:$0xff]
        %v166 = vld [vmem:[%s114 + $0x30] sm:$0xff]
        %v167 = vld [vmem:[%s114 + $0x38] sm:$0xff]
        %176 = vrot.lane.b32.xlu0 %v160, 6
        %v177 = vpop.permute.xlu0 %176
        %178 = vrot.lane.b32.xlu0 %v161, 6
        %v179 = vpop.permute.xlu0 %178
        %180 = vrot.lane.b32.xlu0 %v162, 6
        %v181 = vpop.permute.xlu0 %180
        %182 = vrot.lane.b32.xlu0 %v163, 6
        %v183 = vpop.permute.xlu0 %182
        %184 = vrot.lane.b32.xlu0 %v164, 6
        %v185 = vpop.permute.xlu0 %184
        %186 = vrot.lane.b32.xlu0 %v165, 6
        %v187 = vpop.permute.xlu0 %186
        %188 = vrot.lane.b32.xlu0 %v166, 6
        %v189 = vpop.permute.xlu0 %188
        %190 = vrot.lane.b32.xlu0 %v167, 6
        %v191 = vpop.permute.xlu0 %190
        %vm200 = vcmask 179248
        %201 = vst.msk [vmem:[%s140 + $0x6] sm:$0xff] %vm200, %v177
        %202 = vst.msk [vmem:[%s140 + $0xe] sm:$0xff] %vm200, %v179
        %203 = vst.msk [vmem:[%s140 + $0x26] sm:$0xff] %vm200, %v181
        %204 = vst.msk [vmem:[%s140 + $0x2e] sm:$0xff] %vm200, %v183
        %205 = vst.msk [vmem:[%s140 + $0x46] sm:$0xff] %vm200, %v185
        %206 = vst.msk [vmem:[%s140 + $0x4e] sm:$0xff] %vm200, %v187
        %207 = vst.msk [vmem:[%s140 + $0x66] sm:$0xff] %vm200, %v189
        %208 = vst.msk [vmem:[%s140 + $0x6e] sm:$0xff] %vm200, %v191
        %s209 = smul.u32 4, %s15
        %p210 = scmp.lt.s32.totalorder %s209, 7
        %s211 = scalar_select %p210, %s209, 7
        %s212 = smul.addr %s211, 4
        %s213 = smul.addr %s212, 8
        %s214 = scalar_lea.vmem %s1, %s213
        // Predicated region
        $region29: #{tpu_custom_call.1} parent=23 // pred_check
          %p215 = pneg %p59
        $region30: #{tpu_custom_call.1} parent=23 // pred_check_branch
          %217 = sbr.rel (%p215) target = $region32
        $region31: #{tpu_custom_call.1} parent=23 // pred_region
          %s218 = smul.u32 4, %s15
        $region32: #{tpu_custom_call.1} parent=23 // pred_fallthru
          _
      $region24: #{tpu_custom_call.1} parent=5 // pred_fallthru
        _
      %p219 = scmp.le.s32.totalorder 2, %s10
      // Predicated region
      $region33: #{tpu_custom_call.1} parent=5 // pred_check
        %p220 = pneg %p219
      $region34: #{tpu_custom_call.1} parent=5 // pred_check_branch
        %222 = sbr.rel (%p220) target = $region36
      $region35: #{tpu_custom_call.1} parent=5 // pred_region
        %s223 = ssub.s32 %s10, 2
        // Predicated region
        $region37: #{tpu_custom_call.1} parent=35 // pred_check
          %p224 = pneg %p65
        $region38: #{tpu_custom_call.1} parent=35 // pred_check_branch
          %226 = sbr.rel (%p224) target = $region40
        $region39: #{tpu_custom_call.1} parent=35 // pred_region
          %s227 = smul.u32 4, %s16
          %p228 = scmp.lt.s32.totalorder %s227, 7
          %s229 = scalar_select %p228, %s227, 7
          %s230 = smul.addr %s229, 4
          %s231 = smul.addr %s230, 8
          %s232 = scalar_lea.vmem %s1, %s231
        $region40: #{tpu_custom_call.1} parent=35 // pred_fallthru
          _
      $region36: #{tpu_custom_call.1} parent=5 // pred_fallthru
        _
    $region6: #{tpu_custom_call.1} parent=1 // loop_footer
      %s14 = sadd.s32 1, %s10
    $region7: #{tpu_custom_call.1} parent=1 // loop_footer_branch
      %9 = sbr.rel target = $region3
    $region8: #{tpu_custom_call.1} parent=1 // loop_exit
      _
    %233 = vsyncpa [#allocation3], 1
    %s234 = scalar_lea.sflag [#allocation3], 1
    %235 = vsyncpa %s234, 1

</llo_original>
